<compile_context>
chip_gen: v5e
topology: v5e:2x2
jax: 0.10.0
libtpu: 0.0.40
codegen_flags: <defaults>
</compile_context>

<pallas_src>
import math

import jax
import jax.numpy as jnp
from jax.experimental import pallas as pl
from jax.experimental.pallas import tpu as pltpu


def _round_up(n, m):
    return ((n + m - 1) // m) * m


def _value_kernel(x_ref, w_ref, o_ref):
    # x_ref: (tile, K) activation tile, w_ref: (K, M) resident weight,
    # o_ref: (tile, M) output tile.  One MXU matmul, f32 accumulation.
    o_ref[...] = jnp.dot(
        x_ref[...], w_ref[...], preferred_element_type=jnp.float32
    ).astype(o_ref.dtype)


def value_forward(x, weight, *, tile_rows=8192):
    """y = x @ weight.T  (PyTorch nn.Linear(dim_input, dim_val, bias=False)).

    x:      (..., dim_input)     any leading dims (e.g. (B, T, dim_input))
    weight: (dim_val, dim_input) PyTorch Linear layout
    returns (..., dim_val) in result_type(x.dtype, weight.dtype)
    """
    dim_input = x.shape[-1]
    dim_val, w_k = weight.shape
    assert w_k == dim_input, "weight must be (dim_val, dim_input)"
    lead = x.shape[:-1]
    n_rows = math.prod(lead) if lead else 1
    out_dtype = jnp.result_type(x.dtype, weight.dtype)

    if n_rows == 0:  # degenerate-grid guard
        return jnp.zeros((*lead, dim_val), out_dtype)

    # --- lane-dense packing: P rows per vreg row, block-diagonal weight -----
    pack = 1
    if dim_input < 128 and 128 % dim_input == 0:
        p = 128 // dim_input
        if n_rows % p == 0:
            pack = p
    n_eff = n_rows // pack
    k_eff = pack * dim_input
    m_eff = pack * dim_val

    x2 = x.reshape(n_eff, k_eff)                        # free (row-major view)
    # TODO(synk): in a real model, build the transposed / block-diagonal weight
    # once at init instead of on every forward call.
    wt = jnp.transpose(weight)                          # (dim_input, dim_val)
    if pack > 1:
        wt = jnp.kron(jnp.eye(pack, dtype=wt.dtype), wt)   # (k_eff, m_eff)

    # --- row tiling -----------------------------------------------------------
    min_itemsize = min(jnp.dtype(x.dtype).itemsize, jnp.dtype(out_dtype).itemsize)
    row_align = 8 * (4 // min_itemsize)                 # 8 for f32, 16 for bf16
    if n_eff < row_align:
        tile = n_eff                                    # full-array block
    else:
        tile_pref = max(row_align, (tile_rows // pack) // row_align * row_align)
        # clamp so the grid has >=2 steps: lets v7x's two TensorCores share rows
        tile = min(tile_pref, _round_up(pl.cdiv(n_eff, 2), row_align))
    grid = (pl.cdiv(n_eff, tile),)

    flops = 2 * n_rows * dim_input * dim_val
    bytes_accessed = (
        n_rows * dim_input * jnp.dtype(x.dtype).itemsize
        + k_eff * m_eff * jnp.dtype(wt.dtype).itemsize
        + n_rows * dim_val * jnp.dtype(out_dtype).itemsize
    )

    out = pl.pallas_call(
        _value_kernel,
        out_shape=jax.ShapeDtypeStruct((n_eff, m_eff), out_dtype),
        grid=grid,
        in_specs=[
            pl.BlockSpec((tile, k_eff), lambda i: (i, 0)),   # streamed row tiles
            pl.BlockSpec((k_eff, m_eff), lambda i: (0, 0)),  # resident weight
        ],
        out_specs=pl.BlockSpec((tile, m_eff), lambda i: (i, 0)),
        compiler_params=pltpu.CompilerParams(
            dimension_semantics=("parallel",),   # megacore row sharding on v7x
        ),
        cost_estimate=pl.CostEstimate(
            flops=flops, transcendentals=0, bytes_accessed=bytes_accessed
        ),
    )(x2, wt)

    return out.reshape(*lead, dim_val)                  # free (row-major view)


if __name__ == "__main__":
    B, T = 2, 32
    dim_input, dim_val = 32, 64

    key = jax.random.PRNGKey(0)
    k_x, k_w = jax.random.split(key)
    x_f32 = jax.random.normal(k_x, (B, T, dim_input), jnp.float32)
    # PyTorch Linear weight layout: (dim_val, dim_input), bias=False.
    w_f32 = 0.1 * jax.random.normal(k_w, (dim_val, dim_input), jnp.float32)

    fwd = jax.jit(value_forward)

    # 1) float32, lane-packed path (n_rows divisible by pack=4)
    y = jax.block_until_ready(fwd(x_f32, w_f32))
    y_ref = jnp.dot(
        x_f32.reshape(-1, dim_input), w_f32.T, preferred_element_type=jnp.float32
    ).reshape(B, T, dim_val)
    assert y.shape == (B, T, dim_val) and y.dtype == jnp.float32
    assert jnp.allclose(y, y_ref, atol=2e-3, rtol=2e-3)

    # 2) bfloat16 in -> bfloat16 out (native MXU path, half the HBM traffic)
    x_bf, w_bf = x_f32.astype(jnp.bfloat16), w_f32.astype(jnp.bfloat16)
    y_bf = jax.block_until_ready(fwd(x_bf, w_bf))
    y_bf_ref = jnp.dot(
        x_bf.reshape(-1, dim_input), w_bf.T, preferred_element_type=jnp.float32
    ).astype(jnp.bfloat16).reshape(B, T, dim_val)
    assert y_bf.dtype == jnp.bfloat16
    assert jnp.allclose(
        y_bf.astype(jnp.float32), y_bf_ref.astype(jnp.float32), atol=2e-2, rtol=2e-2
    )

    # 3) ragged row count (not a multiple of the pack factor or the tile):
    #    exercises the partial-last-block path (no padding, no slicing).
    x_rag = jax.random.normal(k_x, (B, 13, dim_input), jnp.float32)
    y_rag = jax.block_until_ready(fwd(x_rag, w_f32))
    y_rag_ref = jnp.dot(
        x_rag.reshape(-1, dim_input), w_f32.T, preferred_element_type=jnp.float32
    ).reshape(B, 13, dim_val)
    assert y_rag.shape == (B, 13, dim_val)
    assert jnp.allclose(y_rag, y_rag_ref, atol=2e-3, rtol=2e-3)

    print("KERNEL_OK")
</pallas_src>

<mosaic_0001>
module attributes {stable_mosaic.version = 11 : i64} {
  func.func @_value_kernel(%arg0: i32, %arg1: memref<8x128xf32, #tpu.memory_space<vmem>>, %arg2: memref<128x256xf32, #tpu.memory_space<vmem>>, %arg3: memref<8x256xf32, #tpu.memory_space<vmem>>) attributes {dimension_semantics = [#tpu.dimension_semantics<parallel>], iteration_bounds = array<i64: 2>, scalar_prefetch = 0 : i64, scratch_operands = 0 : i64, tpu.core_type = #tpu.core_type<tc>, window_params = [{transform_indices = @transform_0, window_bounds = array<i64: 8, 128>}, {pipeline_mode = #tpu.pipeline_mode<synchronous>, transform_indices = @transform_1, window_bounds = array<i64: 128, 256>}, {transform_indices = @transform_2, window_bounds = array<i64: 8, 256>}]} {
    %c0 = arith.constant 0 : index
    %c0_0 = arith.constant 0 : index
    %0 = vector.load %arg1[%c0, %c0_0] : memref<8x128xf32, #tpu.memory_space<vmem>>, vector<8x128xf32>
    %c0_1 = arith.constant 0 : index
    %c0_2 = arith.constant 0 : index
    %1 = vector.load %arg2[%c0_1, %c0_2] : memref<128x256xf32, #tpu.memory_space<vmem>>, vector<128x256xf32>
    %cst = arith.constant dense<0.000000e+00> : vector<8x256xf32>
    %2 = tpu.matmul %0, %1, %cst {dimension_numbers = #tpu.dot_dimension_numbers<[1], [0], [0], [1], [0, 0, 1, 1], [], []>} : vector<8x128xf32>, vector<128x256xf32>, vector<8x256xf32> -> vector<8x256xf32>
    %c0_3 = arith.constant 0 : index
    %c0_4 = arith.constant 0 : index
    %3 = vector.load %arg3[%c0_3, %c0_4] : memref<8x256xf32, #tpu.memory_space<vmem>>, vector<8x256xf32>
    tpu.vector_store %arg3[%c0_3, %c0_4], %2 {strides = array<i32>} : memref<8x256xf32, #tpu.memory_space<vmem>>, vector<8x256xf32>,
    return
  }
  func.func @transform_0(%arg0: i32) -> (i32, i32) {
    %c0_i32 = arith.constant 0 : i32
    %c0_i32_0 = arith.constant 0 : i32
    return %arg0, %c0_i32 : i32, i32
  }
  func.func @transform_1(%arg0: i32) -> (i32, i32) {
    %c0_i32 = arith.constant 0 : i32
    %c0_i32_0 = arith.constant 0 : i32
    %c0_i32_1 = arith.constant 0 : i32
    return %c0_i32, %c0_i32_0 : i32, i32
  }
  func.func @transform_2(%arg0: i32) -> (i32, i32) {
    %c0_i32 = arith.constant 0 : i32
    %c0_i32_0 = arith.constant 0 : i32
    return %arg0, %c0_i32 : i32, i32
  }
}

</mosaic_0001>

<llo_original>
// kernel: value_forward.1
$region0: #{value_forward.1}
  #allocation0 [shape = 'u32[]', space=smem, size = 0x4, offset = 0x4, fixed_abs, tag = 'smem constant byte address 0x4 - core index']
  #allocation1 [shape = 'u32[72,128]{1,0:T(1,128)}', space=vmem, size = 0x9000, scoped, tag = 'internal scratch']
  %s0 = inlined_call_operand.vmem [shape: f32[16,128], index: 0, kind: input, shape index: {}]
  %s1 = inlined_call_operand.vmem [shape: f32[128,256], index: 1, kind: input, shape index: {}]
  %s2 = inlined_call_operand.vmem [shape: f32[16,256], index: 2, kind: output, shape index: {}]
  %s3 = sld [smem:[#allocation0]]
  $region41: #{value_forward.1} parent=0
    _
  %s5 = ssub.s32 1, %s3
  %s6 = scalar_select 0, %s5, %s3
  loop: start=0, step=1, limit=4
  $region2: #{value_forward.1} parent=0 // loop_pre_header
    _
  $region3: #{value_forward.1} parent=0 // loop_header
    %s8 = sphi 0, %s12
    %p9 = scmp.ge.s32.totalorder %s8, 4
    %s18 = sphi 0, %s20
    %s21 = sphi 0, %s18
    %s22 = sphi 0, %s21
    %s38 = sphi 0, %s22
    %s42 = sphi 0, %s42
    %s44 = sphi 0, %s42
    %s45 = sphi 0, %s44
    %s59 = sphi 0, %s45
    %s65 = sphi 0, %s67
    %s68 = sphi 0, %s65
    %s69 = sphi 0, %s68
    %s85 = sphi 0, %s69
  $region4: #{value_forward.1} parent=0 // loop_header_branch
    %11 = sbr.rel (%p9) target = $region8
  $region5: #{value_forward.1} parent=0 // loop_body
    %s13 = ssub.s32 %s8, 1
    %s14 = ssub.s32 %s8, 2
    %s15 = sadd.s32 %s8, 1
    %s16 = ssub.s32 %s8, %s15
    %p17 = scmp.eq.s32.totalorder %s16, 0
    %s19 = sadd.s32 %s18, 1
    %s20 = scalar_select %p17, %s18, %s19
    %p23 = pneg %p17
    %p24 = scmp.eq.s32.totalorder %s8, 1
    %p25 = por %p23, %p24
    %p26 = scmp.ne.s32.totalorder %s18, %s21
    %p27 = scmp.eq.s32.totalorder %s8, 0
    %p28 = por %p26, %p27
    %p29 = scmp.ne.s32.totalorder %s18, %s21
    %p30 = scmp.eq.s32.totalorder %s13, 1
    %p31 = por %p29, %p30
    %p32 = scmp.ne.s32.totalorder %s21, %s22
    %p33 = scmp.eq.s32.totalorder %s13, 0
    %p34 = por %p32, %p33
    %p35 = scmp.ne.s32.totalorder %s21, %s22
    %p36 = scmp.eq.s32.totalorder %s14, 1
    %p37 = por %p35, %p36
    %p39 = scmp.ne.s32.totalorder %s22, %s38
    %p40 = scmp.eq.s32.totalorder %s14, 0
    %p41 = por %p39, %p40
    %s43 = sadd.s32 %s42, 1
    %p46 = scmp.eq.s32.totalorder %s8, 1
    %p47 = scmp.ne.s32.totalorder %s42, %s44
    %p48 = scmp.eq.s32.totalorder %s8, 0
    %p49 = por %p47, %p48
    %p50 = scmp.ne.s32.totalorder %s42, %s44
    %p51 = scmp.eq.s32.totalorder %s13, 1
    %p52 = por %p50, %p51
    %p53 = scmp.ne.s32.totalorder %s44, %s45
    %p54 = scmp.eq.s32.totalorder %s13, 0
    %p55 = por %p53, %p54
    %p56 = scmp.ne.s32.totalorder %s44, %s45
    %p57 = scmp.eq.s32.totalorder %s14, 1
    %p58 = por %p56, %p57
    %p60 = scmp.ne.s32.totalorder %s45, %s59
    %p61 = scmp.eq.s32.totalorder %s14, 0
    %p62 = por %p60, %p61
    %s63 = ssub.s32 %s8, %s15
    %p64 = scmp.eq.s32.totalorder %s63, 0
    %s66 = sadd.s32 %s65, 1
    %s67 = scalar_select %p64, %s65, %s66
    %p70 = pneg %p64
    %p71 = scmp.eq.s32.totalorder %s8, 1
    %p72 = por %p70, %p71
    %p73 = scmp.ne.s32.totalorder %s65, %s68
    %p74 = scmp.eq.s32.totalorder %s8, 0
    %p75 = por %p73, %p74
    %p76 = scmp.ne.s32.totalorder %s65, %s68
    %p77 = scmp.eq.s32.totalorder %s13, 1
    %p78 = por %p76, %p77
    %p79 = scmp.ne.s32.totalorder %s68, %s69
    %p80 = scmp.eq.s32.totalorder %s13, 0
    %p81 = por %p79, %p80
    %p82 = scmp.ne.s32.totalorder %s68, %s69
    %p83 = scmp.eq.s32.totalorder %s14, 1
    %p84 = por %p82, %p83
    %p86 = scmp.ne.s32.totalorder %s69, %s85
    %p87 = scmp.eq.s32.totalorder %s14, 0
    %p88 = por %p86, %p87
    %p89 = scmp.le.s32.totalorder 1, %s8
    %p90 = scmp.lt.s32.totalorder %s8, 3
    %p91 = pnand %p89, %p90
    %p92 = pneg %p91
    // Predicated region
    $region9: #{value_forward.1} parent=5 // pred_check
      _
    $region10: #{value_forward.1} parent=5 // pred_check_branch
      %94 = sbr.rel (%p91) target = $region12
    $region11: #{value_forward.1} parent=5 // pred_region
      %s95 = ssub.s32 %s8, 1
      // Predicated region
      $region13: #{value_forward.1} parent=11 // pred_check
        %p96 = pneg %p55
      $region14: #{value_forward.1} parent=11 // pred_check_branch
        %98 = sbr.rel (%p96) target = $region16
      $region15: #{value_forward.1} parent=11 // pred_region
        _
      $region16: #{value_forward.1} parent=11 // pred_fallthru
        _
    $region12: #{value_forward.1} parent=5 // pred_fallthru
      _
    %p99 = scmp.lt.s32.totalorder %s8, 2
    // Predicated region
    $region17: #{value_forward.1} parent=5 // pred_check
      %p100 = pneg %p99
    $region18: #{value_forward.1} parent=5 // pred_check_branch
      %102 = sbr.rel (%p100) target = $region20
    $region19: #{value_forward.1} parent=5 // pred_region
      // Predicated region
      $region21: #{value_forward.1} parent=19 // pred_check
        %p103 = pneg %p28
      $region22: #{value_forward.1} parent=19 // pred_check_branch
        %105 = sbr.rel (%p103) target = $region24
      $region23: #{value_forward.1} parent=19 // pred_region
        %p106 = scmp.lt.s32.totalorder %s8, 1
        %s107 = scalar_select %p106, %s8, 1
        %s108 = smul.addr %s107, 8
        %s109 = scalar_lea.vmem %s0, %s108
      $region24: #{value_forward.1} parent=19 // pred_fallthru
        _
    $region20: #{value_forward.1} parent=5 // pred_fallthru
      _
    %p110 = scmp.le.s32.totalorder 1, %s8
    %p111 = scmp.lt.s32.totalorder %s8, 3
    %p112 = pnand %p110, %p111
    %p113 = pneg %p112
    // Predicated region
    $region25: #{value_forward.1} parent=5 // pred_check
      _
    $region26: #{value_forward.1} parent=5 // pred_check_branch
      %115 = sbr.rel (%p112) target = $region28
    $region27: #{value_forward.1} parent=5 // pred_region
      %s116 = ssub.s32 %s8, 1
      %p117 = scmp.lt.s32.totalorder %s13, 1
      %s118 = scalar_select %p117, %s13, 1
      %s119 = smul.addr %s118, 8
      %s120 = scalar_lea.vmem %s0, %s119
      %p121 = pneg %p34
      %p122 = pneg %p31
      %p123 = pneg %p55
      %p124 = pneg %p52
      %p125 = pneg %p81
      %p126 = pneg %p78
      %p127 = scmp.lt.s32.totalorder %s13, 1
      %s128 = scalar_select %p127, %s13, 1
      %s129 = smul.addr %s128, 2
      %s130 = smul.addr %s129, 8
      %s131 = scalar_lea.vmem %s2, %s130
      %p132 = scmp.lt.s32.totalorder %s13, 1
      %s133 = scalar_select %p132, %s13, 1
      %s134 = smul.addr %s133, 8
      %s135 = scalar_lea.vmem %s0, %s134
      %p136 = scmp.lt.s32.totalorder %s13, 1
      %s137 = scalar_select %p136, %s13, 1
      %s138 = smul.addr %s137, 2
      %s139 = smul.addr %s138, 8
      %s140 = scalar_lea.vmem %s2, %s139
      %v141 = vld [vmem:[%s135] sm:$0xff]
      %v142 = vld [vmem:[%s1] sm:$0xff]
      %v143 = vld [vmem:[%s1 + $0x8] sm:$0xff]
      %v144 = vld [vmem:[%s1 + $0x10] sm:$0xff]
      %v145 = vld [vmem:[%s1 + $0x18] sm:$0xff]
      %v146 = vld [vmem:[%s1 + $0x20] sm:$0xff]
      %v147 = vld [vmem:[%s1 + $0x28] sm:$0xff]
      %v148 = vld [vmem:[%s1 + $0x30] sm:$0xff]
      %v149 = vld [vmem:[%s1 + $0x38] sm:$0xff]
      %v150 = vld [vmem:[%s1 + $0x40] sm:$0xff]
      %v151 = vld [vmem:[%s1 + $0x48] sm:$0xff]
      %v152 = vld [vmem:[%s1 + $0x50] sm:$0xff]
      %v153 = vld [vmem:[%s1 + $0x58] sm:$0xff]
      %v154 = vld [vmem:[%s1 + $0x60] sm:$0xff]
      %v155 = vld [vmem:[%s1 + $0x68] sm:$0xff]
      %v156 = vld [vmem:[%s1 + $0x70] sm:$0xff]
      %v157 = vld [vmem:[%s1 + $0x78] sm:$0xff]
      %v158 = vld [vmem:[%s1 + $0x80] sm:$0xff]
      %v159 = vld [vmem:[%s1 + $0x88] sm:$0xff]
      %v160 = vld [vmem:[%s1 + $0x90] sm:$0xff]
      %v161 = vld [vmem:[%s1 + $0x98] sm:$0xff]
      %v162 = vld [vmem:[%s1 + $0xa0] sm:$0xff]
      %v163 = vld [vmem:[%s1 + $0xa8] sm:$0xff]
      %v164 = vld [vmem:[%s1 + $0xb0] sm:$0xff]
      %v165 = vld [vmem:[%s1 + $0xb8] sm:$0xff]
      %v166 = vld [vmem:[%s1 + $0xc0] sm:$0xff]
      %v167 = vld [vmem:[%s1 + $0xc8] sm:$0xff]
      %v168 = vld [vmem:[%s1 + $0xd0] sm:$0xff]
      %v169 = vld [vmem:[%s1 + $0xd8] sm:$0xff]
      %v170 = vld [vmem:[%s1 + $0xe0] sm:$0xff]
      %v171 = vld [vmem:[%s1 + $0xe8] sm:$0xff]
      %v172 = vld [vmem:[%s1 + $0xf0] sm:$0xff]
      %v173 = vld [vmem:[%s1 + $0xf8] sm:$0xff]
      %174 = vmatpush.msra.mxu0 %v172
      %175 = vmatpush.msra.mxu0 %v170
      %176 = vmatpush.msra.mxu0 %v168
      %177 = vmatpush.msra.mxu0 %v166
      %178 = vmatpush.msra.mxu0 %v164
      %179 = vmatpush.msra.mxu0 %v162
      %180 = vmatpush.msra.mxu0 %v160
      %181 = vmatpush.msra.mxu0 %v158
      %182 = vmatpush.msra.mxu0 %v156
      %183 = vmatpush.msra.mxu0 %v154
      %184 = vmatpush.msra.mxu0 %v152
      %185 = vmatpush.msra.mxu0 %v150
      %186 = vmatpush.msra.mxu0 %v148
      %187 = vmatpush.msra.mxu0 %v146
      %188 = vmatpush.msra.mxu0 %v144
      %189 = vmatpush.msra.mxu0 %v142
      %190 = vmatmul.f32.gmra.mxu0 %v141
      %v191 = vpop.f32.mrf.mxu0
      %v192 = vadd.f32 0.0, %v191
      %193 = vdwg.mxu0
      %194 = vmatpush.msra.mxu0 %v173
      %195 = vmatpush.msra.mxu0 %v171
      %196 = vmatpush.msra.mxu0 %v169
      %197 = vmatpush.msra.mxu0 %v167
      %198 = vmatpush.msra.mxu0 %v165
      %199 = vmatpush.msra.mxu0 %v163
      %200 = vmatpush.msra.mxu0 %v161
      %201 = vmatpush.msra.mxu0 %v159
      %202 = vmatpush.msra.mxu0 %v157
      %203 = vmatpush.msra.mxu0 %v155
      %204 = vmatpush.msra.mxu0 %v153
      %205 = vmatpush.msra.mxu0 %v151
      %206 = vmatpush.msra.mxu0 %v149
      %207 = vmatpush.msra.mxu0 %v147
      %208 = vmatpush.msra.mxu0 %v145
      %209 = vmatpush.msra.mxu0 %v143
      %210 = vmatmul.f32.gmra.mxu0 %v141
      %v211 = vpop.f32.mrf.mxu0
      %v212 = vadd.f32 0.0, %v211
      %213 = vdwg.mxu0
      %214 = vst [vmem:[%s140] sm:$0xff] %v192
      %215 = vst [vmem:[%s140 + $0x8] sm:$0xff] %v212
      %p216 = scmp.lt.s32.totalorder %s13, 1
      %s217 = scalar_select %p216, %s13, 1
      %s218 = smul.addr %s217, 2
      %s219 = smul.addr %s218, 8
      %s220 = scalar_lea.vmem %s2, %s219
      // Predicated region
      $region29: #{value_forward.1} parent=27 // pred_check
        %p221 = pneg %p78
      $region30: #{value_forward.1} parent=27 // pred_check_branch
        %223 = sbr.rel (%p221) target = $region32
      $region31: #{value_forward.1} parent=27 // pred_region
        _
      $region32: #{value_forward.1} parent=27 // pred_fallthru
        _
    $region28: #{value_forward.1} parent=5 // pred_fallthru
      _
    %p224 = scmp.le.s32.totalorder 2, %s8
    // Predicated region
    $region33: #{value_forward.1} parent=5 // pred_check
      %p225 = pneg %p224
    $region34: #{value_forward.1} parent=5 // pred_check_branch
      %227 = sbr.rel (%p225) target = $region36
    $region35: #{value_forward.1} parent=5 // pred_region
      %s228 = ssub.s32 %s8, 2
      // Predicated region
      $region37: #{value_forward.1} parent=35 // pred_check
        %p229 = pneg %p84
      $region38: #{value_forward.1} parent=35 // pred_check_branch
        %231 = sbr.rel (%p229) target = $region40
      $region39: #{value_forward.1} parent=35 // pred_region
        %p232 = scmp.lt.s32.totalorder %s14, 1
        %s233 = scalar_select %p232, %s14, 1
        %s234 = smul.addr %s233, 2
        %s235 = smul.addr %s234, 8
        %s236 = scalar_lea.vmem %s2, %s235
      $region40: #{value_forward.1} parent=35 // pred_fallthru
        _
    $region36: #{value_forward.1} parent=5 // pred_fallthru
      _
  $region6: #{value_forward.1} parent=0 // loop_footer
    %s12 = sadd.s32 1, %s8
  $region7: #{value_forward.1} parent=0 // loop_footer_branch
    %7 = sbr.rel target = $region3
  $region8: #{value_forward.1} parent=0 // loop_exit
    _

</llo_original>
